<compile_context>
chip_gen: v7x
topology: tpu7x:2x2x1
jax: 0.10.0
libtpu: 0.0.40
codegen_flags: <defaults>
</compile_context>

<pallas_src>
import functools

import jax
import jax.numpy as jnp
from jax import lax
from jax.experimental import pallas as pl
from jax.experimental.pallas import tpu as pltpu


def _ce_onehot_kernel(preds_ref, labels_ref, out_ref, *, n_rows: int):
    i = pl.program_id(0)
    tile_n = preds_ref.shape[0]

    p = preds_ref[...]      # [TN, C], storage dtype
    l = labels_ref[...]     # [TN, C], storage dtype

    # Numerically stable per-row logsumexp; max is exact in any dtype, the
    # shifted term is the single f32 [TN, C] working value and is reused below.
    m32 = jnp.max(p, axis=-1, keepdims=True).astype(jnp.float32)          # [TN, 1]
    shifted = p.astype(jnp.float32) - m32                                 # [TN, C]
    log_z = jnp.log(jnp.sum(jnp.exp(shifted), axis=-1, keepdims=True))    # [TN, 1]

    # per-row loss = sum(-l * (p - m - log_z)) = sum(l)*log_z - sum(l*(p-m))
    l32 = l.astype(jnp.float32)
    l_sum = jnp.sum(l32, axis=-1, keepdims=True)                          # [TN, 1]
    lshift_sum = jnp.sum(l32 * shifted, axis=-1, keepdims=True)           # [TN, 1]
    per_row = l_sum * log_z - lshift_sum                                  # [TN, 1]

    # Select-mask rows past the true batch size (last, partial tile reads
    # padding; keep this as a select, NOT a multiplicative mask).
    row_ids = i * tile_n + lax.broadcasted_iota(jnp.int32, (tile_n, 1), 0)
    per_row = jnp.where(row_ids < n_rows, per_row, 0.0)

    partial = jnp.sum(per_row, axis=0, keepdims=True)                     # [1, 1]
    # Lane-dense (1, 128) output slab per tile -> unmasked vector stores.
    out_ref[...] = jnp.broadcast_to(partial.reshape(1, 1, 1), out_ref.shape)


def _physical_vmem_bytes() -> int:
    try:
        info = pltpu.get_tpu_info()
        cap = getattr(info, "vmem_capacity_bytes", None)
        if cap:
            return int(cap)
    except Exception:
        pass
    return 64 << 20  # conservative fallback (v7x per-TensorCore)


def _sublane_align(*dtypes) -> int:
    # 8 rows for 4-byte dtypes, 16 for 2-byte, 32 for 1-byte (vreg packing).
    return max([8] + [8 * 4 // max(1, jnp.dtype(d).itemsize) for d in dtypes])


def _choose_tile_n(n: int, c: int, preds_dtype, labels_dtype) -> int:
    pi = jnp.dtype(preds_dtype).itemsize
    li = jnp.dtype(labels_dtype).itemsize
    align = _sublane_align(preds_dtype, labels_dtype)

    # Per-row VMEM cost: double-buffered preds+labels DMA tiles plus roughly
    # two f32-sized in-kernel temporaries (shifted logits + converted labels).
    per_row = c * (2 * (pi + li) + 8)
    # Tile budget scales with the chip's physical VMEM (128 MiB v5e/v6e,
    # 64 MiB per-TC v7x); ~40% leaves headroom for output/compiler scratch.
    budget = int(_physical_vmem_bytes() * 0.4)
    tn = max(align, (budget // per_row) // align * align)

    if tn >= n:
        # Whole batch fits in one tile. If the batch is big enough to matter,
        # split into two tiles so both v7x TensorCores get work; the extra
        # grid step is negligible on single-TC v5e/v6e.
        if n >= 4 * align:
            half = ((n + 1) // 2 + align - 1) // align * align
            return int(min(half, n))
        return n
    return int(tn)


def cross_entropy_one_hot(preds: jax.Array, labels: jax.Array, *, tile_n: int | None = None) -> jax.Array:
    """preds: [N, C] float logits, labels: [N, C] one-hot / soft labels.

    Returns scalar f32 loss matching
        torch.mean(torch.sum(-labels * log_softmax(preds, -1), -1)).
    """
    assert preds.shape == labels.shape and preds.ndim == 2
    n, c = preds.shape
    pi = jnp.dtype(preds.dtype).itemsize
    li = jnp.dtype(labels.dtype).itemsize

    if tile_n is None:
        tile_n = _choose_tile_n(n, c, preds.dtype, labels.dtype)
    tile_n = int(min(tile_n, n))
    num_tiles = pl.cdiv(n, tile_n)

    # Explicit VMEM limit: actual per-tile footprint (double-buffered input
    # tiles + f32 working temporaries) plus fixed headroom, capped at ~80% of
    # this generation's physical VMEM.
    tile_bytes = tile_n * c * (2 * (pi + li) + 8)
    vmem_cap = _physical_vmem_bytes()
    vmem_limit = int(min(max(tile_bytes + (4 << 20), 8 << 20), int(vmem_cap * 0.8)))

    kernel = functools.partial(_ce_onehot_kernel, n_rows=n)

    partials = pl.pallas_call(
        kernel,
        out_shape=jax.ShapeDtypeStruct((num_tiles, 1, 128), jnp.float32),
        grid_spec=pltpu.PrefetchScalarGridSpec(
            num_scalar_prefetch=0,
            grid=(num_tiles,),
            in_specs=[
                pl.BlockSpec((tile_n, c), lambda i: (i, 0)),
                pl.BlockSpec((tile_n, c), lambda i: (i, 0)),
            ],
            out_specs=pl.BlockSpec((1, 1, 128), lambda i: (i, 0, 0)),
        ),
        compiler_params=pltpu.CompilerParams(
            dimension_semantics=("parallel",),   # independent tiles -> megacore on v7x
            vmem_limit_bytes=vmem_limit,
        ),
    )(preds, labels)

    # One partial sum per tile; reduce and apply the mean's true divide once.
    return jnp.sum(partials[:, 0, 0]) / jnp.float32(n)


if __name__ == "__main__":
    key = jax.random.PRNGKey(0)
    k_logits, k_idx, k_soft = jax.random.split(key, 3)

    # Small shapes consistent with the module: batch=8, 32 classes.
    N, C = 8, 32
    preds = jax.random.normal(k_logits, (N, C), dtype=jnp.float32)
    label_idx = jax.random.randint(k_idx, (N,), 0, C)
    labels = jax.nn.one_hot(label_idx, C, dtype=jnp.float32)

    loss = jax.block_until_ready(cross_entropy_one_hot(preds, labels))
    ref = jnp.mean(jnp.sum(-labels * jax.nn.log_softmax(preds, axis=-1), -1))
    assert jnp.allclose(loss, ref, atol=1e-5, rtol=1e-5), (loss, ref)

    # Exercise the tiled multi-program path (N not divisible by the tile) with
    # soft (non-one-hot) labels to validate masking + partial reduction.
    N2, C2 = 20, 128
    preds2 = jax.random.normal(k_logits, (N2, C2), dtype=jnp.float32)
    soft2 = jax.nn.softmax(jax.random.normal(k_soft, (N2, C2), dtype=jnp.float32), -1)
    loss2 = jax.block_until_ready(cross_entropy_one_hot(preds2, soft2, tile_n=8))
    ref2 = jnp.mean(jnp.sum(-soft2 * jax.nn.log_softmax(preds2, axis=-1), -1))
    assert jnp.allclose(loss2, ref2, atol=1e-5, rtol=1e-5), (loss2, ref2)

    # Exercise the auto-tile (default) path including the >=2-tile split and
    # bf16 sublane alignment.
    N3, C3 = 72, 256
    preds3 = jax.random.normal(k_logits, (N3, C3), dtype=jnp.bfloat16)
    idx3 = jax.random.randint(k_idx, (N3,), 0, C3)
    labels3 = jax.nn.one_hot(idx3, C3, dtype=jnp.bfloat16)
    loss3 = jax.block_until_ready(cross_entropy_one_hot(preds3, labels3))
    ref3 = jnp.mean(jnp.sum(-labels3.astype(jnp.float32)
                            * jax.nn.log_softmax(preds3.astype(jnp.float32), axis=-1), -1))
    assert jnp.allclose(loss3, ref3, atol=2e-2, rtol=2e-2), (loss3, ref3)

    print("KERNEL_OK")
</pallas_src>

<mosaic_0001>
module attributes {stable_mosaic.version = 11 : i64} {
  func.func @_ce_onehot_kernel(%arg0: i32, %arg1: memref<8x32xf32, #tpu.memory_space<vmem>>, %arg2: memref<8x32xf32, #tpu.memory_space<vmem>>, %arg3: memref<1x1x128xf32, #tpu.memory_space<vmem>>) attributes {dimension_semantics = [#tpu.dimension_semantics<parallel>], iteration_bounds = array<i64: 1>, scalar_prefetch = 0 : i64, scratch_operands = 0 : i64, tpu.core_type = #tpu.core_type<tc>, window_params = [{transform_indices = @transform_0, window_bounds = array<i64: 8, 32>}, {transform_indices = @transform_1, window_bounds = array<i64: 8, 32>}, {transform_indices = @transform_2, window_bounds = array<i64: 1, 1, 128>}]} {
    %c0 = arith.constant 0 : index
    %c0_0 = arith.constant 0 : index
    %0 = vector.load %arg1[%c0, %c0_0] : memref<8x32xf32, #tpu.memory_space<vmem>>, vector<8x32xf32>
    %c0_1 = arith.constant 0 : index
    %c0_2 = arith.constant 0 : index
    %1 = vector.load %arg2[%c0_1, %c0_2] : memref<8x32xf32, #tpu.memory_space<vmem>>, vector<8x32xf32>
    %cst = arith.constant dense<0xFF800000> : vector<8xf32>
    %2 = vector.multi_reduction <maximumf>, %0, %cst [1] : vector<8x32xf32> to vector<8xf32>
    %3 = vector.shape_cast %2 : vector<8xf32> to vector<8x1xf32>
    %4 = vector.broadcast %3 : vector<8x1xf32> to vector<8x32xf32>
    %5 = arith.subf %0, %4 : vector<8x32xf32>
    %6 = math.exp %5 : vector<8x32xf32>
    %cst_3 = arith.constant dense<0.000000e+00> : vector<8xf32>
    %7 = vector.multi_reduction <add>, %6, %cst_3 [1] : vector<8x32xf32> to vector<8xf32>
    %8 = vector.shape_cast %7 : vector<8xf32> to vector<8x1xf32>
    %9 = math.log %8 : vector<8x1xf32>
    %cst_4 = arith.constant dense<0.000000e+00> : vector<8xf32>
    %10 = vector.multi_reduction <add>, %1, %cst_4 [1] : vector<8x32xf32> to vector<8xf32>
    %11 = vector.shape_cast %10 : vector<8xf32> to vector<8x1xf32>
    %12 = arith.mulf %1, %5 : vector<8x32xf32>
    %cst_5 = arith.constant dense<0.000000e+00> : vector<8xf32>
    %13 = vector.multi_reduction <add>, %12, %cst_5 [1] : vector<8x32xf32> to vector<8xf32>
    %14 = vector.shape_cast %13 : vector<8xf32> to vector<8x1xf32>
    %15 = arith.mulf %11, %9 : vector<8x1xf32>
    %16 = arith.subf %15, %14 : vector<8x1xf32>
    %c8_i32 = arith.constant 8 : i32
    %17 = arith.muli %arg0, %c8_i32 : i32
    %18 = tpu.iota {dimensions = array<i32: 0>} : vector<8x1xi32>
    %19 = vector.broadcast %17 : i32 to vector<8x1xi32>
    %20 = arith.addi %19, %18 : vector<8x1xi32>
    %c8_i32_6 = arith.constant 8 : i32
    %21 = vector.broadcast %c8_i32_6 : i32 to vector<8x1xi32>
    %22 = arith.cmpi slt, %20, %21 : vector<8x1xi32>
    %cst_7 = arith.constant 0.000000e+00 : f32
    %23 = vector.broadcast %cst_7 : f32 to vector<8x1xf32>
    %24 = arith.select %22, %16, %23 : vector<8x1xi1>, vector<8x1xf32>
    %cst_8 = arith.constant dense<0.000000e+00> : vector<1xf32>
    %25 = vector.multi_reduction <add>, %24, %cst_8 [0] : vector<8x1xf32> to vector<1xf32>
    %26 = vector.shape_cast %25 : vector<1xf32> to vector<1x1xf32>
    %27 = vector.shape_cast %26 : vector<1x1xf32> to vector<1x1x1xf32>
    %28 = vector.shape_cast %27 : vector<1x1x1xf32> to vector<1x1x1xf32>
    %29 = vector.broadcast %28 : vector<1x1x1xf32> to vector<1x1x128xf32>
    %c0_9 = arith.constant 0 : index
    %c0_10 = arith.constant 0 : index
    %c0_11 = arith.constant 0 : index
    %30 = vector.load %arg3[%c0_9, %c0_10, %c0_11] : memref<1x1x128xf32, #tpu.memory_space<vmem>>, vector<1x1x128xf32>
    tpu.vector_store %arg3[%c0_9, %c0_10, %c0_11], %29 {strides = array<i32>} : memref<1x1x128xf32, #tpu.memory_space<vmem>>, vector<1x1x128xf32>,
    return
  }
  func.func @transform_0(%arg0: i32) -> (i32, i32) {
    %c0_i32 = arith.constant 0 : i32
    %c0_i32_0 = arith.constant 0 : i32
    return %arg0, %c0_i32 : i32, i32
  }
  func.func @transform_1(%arg0: i32) -> (i32, i32) {
    %c0_i32 = arith.constant 0 : i32
    %c0_i32_0 = arith.constant 0 : i32
    return %arg0, %c0_i32 : i32, i32
  }
  func.func @transform_2(%arg0: i32) -> (i32, i32, i32) {
    %c0_i32 = arith.constant 0 : i32
    %c0_i32_0 = arith.constant 0 : i32
    %c0_i32_1 = arith.constant 0 : i32
    return %arg0, %c0_i32, %c0_i32_0 : i32, i32, i32
  }
}

</mosaic_0001>

<llo_original>
// kernel: tpu_custom_call.1
$region0: #{tpu_custom_call.1}
  #allocation0 [shape = 'u32[]', space=smem, size = 0x4, offset = 0x4, fixed_abs, tag = 'smem constant byte address 0x4 - core index']
  #allocation1 [shape = 'u32[144,128]{1,0:T(1,128)}', space=vmem, size = 0x12000, scoped, tag = 'internal scratch']
  %s0 = inlined_call_operand.hbm [shape: f32[8,32], index: 0, kind: input, shape index: {}]
  %s1 = inlined_call_operand.hbm [shape: f32[8,32], index: 1, kind: input, shape index: {}]
  %s2 = inlined_call_operand.hbm [shape: f32[1,1,128], index: 2, kind: output, shape index: {}]
  %s3 = sld [smem:[#allocation0]]
  $region26: #{tpu_custom_call.1} parent=0
    _
  %s5 = ssub.s32 1, %s3
  %s6 = scalar_select 0, %s5, %s3
  $region1: #{tpu_custom_call.1} parent=0
    #allocation2 [shape = 'u8[4096]{0}', space=vmem, size = 0x1000, scoped, tag = 'input window, operand 0, single buffered']
    #allocation3 [shape = 's32[1]{0}', space=sflag, size = 0x4, scoped, tag = 'scoped memory for tpu_custom_call.1']
    #allocation4 [shape = 's32[1]{0}', space=sflag, size = 0x4, scoped, tag = 'scoped memory for tpu_custom_call.1']
    #allocation5 [shape = 'u8[4096]{0}', space=vmem, size = 0x1000, scoped, tag = 'input window, operand 1, single buffered']
    #allocation6 [shape = 's32[1]{0}', space=sflag, size = 0x4, scoped, tag = 'scoped memory for tpu_custom_call.1']
    #allocation7 [shape = 'u8[512]{0}', space=vmem, size = 0x400, scoped, tag = 'output window, operand 0, single buffered']
    %7 = vsyncpa [#allocation3], 0
    %8 = vsyncpa [#allocation6], 0
    %9 = vsyncpa [#allocation4], 0
    // Predicated region
    $region2: #{tpu_custom_call.1} parent=1 // pred_check
      _
    $region3: #{tpu_custom_call.1} parent=1 // pred_check_branch
      %11 = sbr.rel (0) target = $region5
    $region4: #{tpu_custom_call.1} parent=1 // pred_region
      %s13 = ssub.s32 128, 128
      %14 = vsyncadd [#allocation3], %s13
      %s16 = sshll.u32 [#allocation2], 4
      %s17 = int_to_ptr.vmem [resolvable:$true] %s16
      %19 = dma.hbm_to_vmem [thread:$0]  %s0, 128, %s17, [#allocation3]
    $region5: #{tpu_custom_call.1} parent=1 // pred_fallthru
      _
    // Predicated region
    $region6: #{tpu_custom_call.1} parent=1 // pred_check
      _
    $region7: #{tpu_custom_call.1} parent=1 // pred_check_branch
      %21 = sbr.rel (0) target = $region9
    $region8: #{tpu_custom_call.1} parent=1 // pred_region
      %s23 = ssub.s32 128, 128
      %24 = vsyncadd [#allocation6], %s23
      %s26 = sshll.u32 [#allocation5], 4
      %s27 = int_to_ptr.vmem [resolvable:$true] %s26
      %29 = dma.hbm_to_vmem [thread:$0]  %s1, 128, %s27, [#allocation6]
    $region9: #{tpu_custom_call.1} parent=1 // pred_fallthru
      _
    // Predicated region
    $region10: #{tpu_custom_call.1} parent=1 // pred_check
      _
    $region11: #{tpu_custom_call.1} parent=1 // pred_check_branch
      %31 = sbr.rel (0) target = $region13
    $region12: #{tpu_custom_call.1} parent=1 // pred_region
      %32 = dma.done [#allocation3], 128
    $region13: #{tpu_custom_call.1} parent=1 // pred_fallthru
      _
    // Predicated region
    $region14: #{tpu_custom_call.1} parent=1 // pred_check
      _
    $region15: #{tpu_custom_call.1} parent=1 // pred_check_branch
      %34 = sbr.rel (0) target = $region17
    $region16: #{tpu_custom_call.1} parent=1 // pred_region
      %35 = dma.done [#allocation6], 128
    $region17: #{tpu_custom_call.1} parent=1 // pred_fallthru
      _
    %v36 = vld [vmem:[#allocation2] sm:$0xff]
    %v37 = vld [vmem:[#allocation5] sm:$0xff]
    %vm38 = vcmask 261120
    %v39 = vsel %vm38, %v36, -inf
    %40 = vmax.xlane.f32.xlu0 %v39
    %v41 = vpop.xlane.xlu0 %40
    %v42 = vsub.f32 %v36, %v41
    %v43 = vmul.f32 %v42, 1.442695
    %v44 = vpow.pop %v43
    %v45 = vsel %vm38, %v44, 0.0
    %46 = vadd.xlane.f32.xlu0 %v45
    %v47 = vpop.xlane.xlu0 %46
    %v48 = vlog2.pop %v47
    %v49 = vmul.f32 %v48, 0.6931472
    %v50 = vsel %vm38, %v37, 0.0
    %51 = vadd.xlane.f32.xlu0 %v50
    %v52 = vpop.xlane.xlu0 %51
    %v53 = vmul.f32 %v37, %v42
    %v54 = vsel %vm38, %v53, 0.0
    %55 = vadd.xlane.f32.xlu0 %v54
    %v56 = vpop.xlane.xlu0 %55
    %v57 = vmul.f32 %v52, %v49
    %v58 = vsub.f32 %v57, %v56
    %s59 = smul.u32 0, 8
    %v60 = vlaneseq
    %v61 = vshrl.u32 %v60, 7
    %v62 = vstv %s59
    %v63 = vadd.s32 %v62, %v61
    %vm64 = vcmp.lt.s32.totalorder %v63, 8
    %v65 = vsel %vm64, %v58, 0.0
    %v66 = vrot.slane %v65, 4
    %v67 = vadd.f32 %v65, %v66
    %v68 = vrot.slane %v67, 2
    %v69 = vadd.f32 %v67, %v68
    %v70 = vrot.slane %v69, 1
    %v71 = vadd.f32 %v69, %v70
    %72 = vst [vmem:[#allocation7] sm:$0x1] %v71
    // Predicated region
    $region18: #{tpu_custom_call.1} parent=1 // pred_check
      _
    $region19: #{tpu_custom_call.1} parent=1 // pred_check_branch
      %74 = sbr.rel (0) target = $region21
    $region20: #{tpu_custom_call.1} parent=1 // pred_region
      %s76 = ssub.s32 16, 16
      %77 = vsyncadd [#allocation4], %s76
      %s79 = sshll.u32 [#allocation7], 4
      %s80 = int_to_ptr.vmem [resolvable:$true] %s79
      %82 = dma.vmem_to_hbm [thread:$0]  %s80, 16, %s2, [#allocation4]
    $region21: #{tpu_custom_call.1} parent=1 // pred_fallthru
      _
    // Predicated region
    $region22: #{tpu_custom_call.1} parent=1 // pred_check
      _
    $region23: #{tpu_custom_call.1} parent=1 // pred_check_branch
      %84 = sbr.rel (0) target = $region25
    $region24: #{tpu_custom_call.1} parent=1 // pred_region
      %85 = dma.done [#allocation4], 16
    $region25: #{tpu_custom_call.1} parent=1 // pred_fallthru
      _
    %86 = vsyncpa [#allocation3], 1
    %87 = vsyncpa [#allocation6], 1
    %88 = vsyncpa [#allocation4], 1

</llo_original>
